<compile_context>
chip_gen: v7x
topology: tpu7x:2x2x1
jax: 0.10.0
libtpu: 0.0.40
codegen_flags: <defaults>
</compile_context>

<pallas_src>
import jax
import jax.numpy as jnp
from jax import lax
from jax.experimental import pallas as pl
from jax.experimental.pallas import tpu as pltpu

MATMUL_DTYPE = jnp.bfloat16   # MXU operand dtype (f32 accumulate).


# ------------------------------ fused kernel --------------------------------

def _mish_f32(x):
    # mish(x) = x * tanh(softplus(x)) = x * (s^2 - 1) / (s^2 + 1), s = 1 + e^x.
    # exp clamp at 20 is benign (mish(x) ~= x there); s^2 ~ 2.4e17 << f32 max.
    s = 1.0 + jnp.exp(jnp.minimum(x, 20.0))
    s2 = s * s
    return x * (s2 - 1.0) * pl.reciprocal(s2 + 1.0, approx=True)


def _fused_kernel(xT_ref, im5_ref, im3_ref, w1_ref, b1_ref, wbr_ref, bmap_ref,
                  w3_ref, b3_ref, w4_ref, b4_ref, o_ref):
    f32 = jnp.float32

    # conv1 (1x1 + bias): (d4, dim) @ (dim, L)
    c1 = jnp.dot(w1_ref[...], xT_ref[...],
                 preferred_element_type=f32) + b1_ref[...]
    conv_x = _mish_f32(c1)                                        # (d4, L)

    # CD/AD/RD branches, folded through conv1 into ONE 5x5 conv on x plus a
    # precomputed boundary bias map (handles conv1's bias under zero padding).
    br = _mish_f32(
        jnp.dot(wbr_ref[...], im5_ref[...], preferred_element_type=f32)
        + bmap_ref[...])                                          # (3*d4, L)

    # conv3 (1x1) over channel concat [conv_x | cd | ad | rd]:
    # one sublane stack, one matmul.
    cat = jnp.concatenate([conv_x, br], axis=0).astype(w3_ref.dtype)  # (dim, L)
    out3 = _mish_f32(
        jnp.dot(w3_ref[...], cat, preferred_element_type=f32) + b3_ref[...])

    # conv4 (3x3 over x) via wrapper-hoisted im2col.
    x4 = _mish_f32(
        jnp.dot(w4_ref[...], im3_ref[...], preferred_element_type=f32)
        + b4_ref[...])                                            # (d2, L)

    # Final channel concat -> (dim, L); lane-dense unmasked store.
    o_ref[...] = jnp.concatenate([out3, x4], axis=0).astype(o_ref.dtype)


# --------------------------- parameters / folding ----------------------------

def make_params(dim, key):
    ks = jax.random.split(key, 9)
    d4, d2 = dim // 4, dim // 2
    s, sb = 0.2, 0.05
    return {
        "w1": jax.random.normal(ks[0], (d4, dim, 1, 1), jnp.float32) * s,
        "b1": jax.random.normal(ks[1], (d4,), jnp.float32) * sb,
        "w3": jax.random.normal(ks[2], (d2, dim, 1, 1), jnp.float32) * s,
        "b3": jax.random.normal(ks[3], (d2,), jnp.float32) * sb,
        "w4": jax.random.normal(ks[4], (d2, dim, 3, 3), jnp.float32) * s,
        "b4": jax.random.normal(ks[5], (d2,), jnp.float32) * sb,
        "wcd": jax.random.normal(ks[6], (d4, d4, 3, 3), jnp.float32) * s,
        "wad": jax.random.normal(ks[7], (d4, d4, 3, 3), jnp.float32) * s,
        "wrd": jax.random.normal(ks[8], (d4, d4, 3, 3), jnp.float32) * s,
    }


def effective_weights(p):
    """Fold CD / AD / RD re-parameterizations into plain conv weights."""
    d4 = p["wcd"].shape[0]

    # CDConv2d: conv3x3(x, w) - conv1x1(x, w.sum(hw))  ==  center tap reduced
    # by the kernel's spatial sum.
    w_cd = p["wcd"].at[:, :, 1, 1].add(-p["wcd"].sum(axis=(2, 3)))

    # ADConv2d: w - w[:, :, [3,0,1,6,4,2,7,8,5]] on the flattened taps.
    perm = jnp.array([3, 0, 1, 6, 4, 2, 7, 8, 5])
    wf = p["wad"].reshape(d4, d4, 9)
    w_ad = (wf - wf[:, :, perm]).reshape(d4, d4, 3, 3)

    # RDConv2d: embed the 8 outer taps into a 5x5 kernel (+ outer ring,
    # - inner ring, center 0).
    wrf = p["wrd"].reshape(d4, d4, 9)
    buf = jnp.zeros((d4, d4, 25), jnp.float32)
    buf = buf.at[:, :, jnp.array([0, 2, 4, 10, 14, 20, 22, 24])].set(wrf[:, :, 1:])
    buf = buf.at[:, :, jnp.array([6, 7, 8, 11, 13, 16, 17, 18])].set(-wrf[:, :, 1:])
    w_rd = buf.reshape(d4, d4, 5, 5)
    return w_cd, w_ad, w_rd


def _prep_operands(x_nhwc, p, compute_dtype):
    """All layout / im2col / weight-folding work, done wrapper-side in XLA."""
    N, H, W, dim = x_nhwc.shape
    d4, d2 = dim // 4, dim // 2
    HW = H * W
    L = N * HW

    # ---- activations: lane index = n*HW + y*W + x ---------------------------
    xT = jnp.transpose(x_nhwc, (3, 0, 1, 2)).reshape(dim, L)     # (dim, L)

    def im2col(x, K, pad):
        xp = jnp.pad(x, ((0, 0), (pad, pad), (pad, pad), (0, 0)))
        taps = [xp[:, ky:ky + H, kx:kx + W, :]
                for ky in range(K) for kx in range(K)]
        t = jnp.stack(taps, axis=0)                              # (K*K,N,H,W,C)
        return jnp.transpose(t, (0, 4, 1, 2, 3)).reshape(K * K * dim, L)

    im3x = im2col(x_nhwc, 3, 1)                                  # (9*dim, L)
    im5x = im2col(x_nhwc, 5, 2)                                  # (25*dim, L)

    # ---- weights ------------------------------------------------------------
    w_cd, w_ad, w_rd = effective_weights(p)
    w_cd5 = jnp.pad(w_cd, ((0, 0), (0, 0), (1, 1), (1, 1)))
    w_ad5 = jnp.pad(w_ad, ((0, 0), (0, 0), (1, 1), (1, 1)))
    w_br = jnp.concatenate([w_cd5, w_ad5, w_rd], axis=0)         # (3*d4,d4,5,5)

    w1 = p["w1"][:, :, 0, 0]                                     # (d4, dim)
    # Compose branch(5x5, zero-pad) with conv1(1x1): effective 5x5 conv on x.
    w_br_eff = jnp.einsum("ockl,ci->oikl", w_br, w1)             # (3*d4,dim,5,5)
    wbr_mat = jnp.transpose(w_br_eff, (0, 2, 3, 1)).reshape(3 * d4, 25 * dim)

    # Boundary-aware contribution of conv1's bias b1 under the branch's zero
    # padding: conv of a constant b1 image with w_br (zero padded).
    b1_img = jnp.broadcast_to(p["b1"][None, None, None, :], (1, H, W, d4))
    bmap = lax.conv_general_dilated(
        b1_img, jnp.transpose(w_br, (2, 3, 1, 0)), (1, 1), ((2, 2), (2, 2)),
        dimension_numbers=("NHWC", "HWIO", "NHWC"))              # (1,H,W,3*d4)
    bmap = jnp.transpose(bmap[0], (2, 0, 1)).reshape(3 * d4, HW)
    bmap = jnp.tile(bmap, (1, N)).astype(jnp.float32)            # (3*d4, L)

    w3 = p["w3"][:, :, 0, 0]                                     # (d2, dim)
    w4 = jnp.transpose(p["w4"], (0, 2, 3, 1)).reshape(d2, 9 * dim)

    cd = compute_dtype
    return (
        xT.astype(cd), im5x.astype(cd), im3x.astype(cd),
        w1.astype(cd),
        p["b1"].reshape(d4, 1).astype(jnp.float32),
        wbr_mat.astype(cd),
        bmap,
        w3.astype(cd),
        p["b3"].reshape(d2, 1).astype(jnp.float32),
        w4.astype(cd),
        p["b4"].reshape(d2, 1).astype(jnp.float32),
    )


# ------------------------------- forward ------------------------------------

def de_module_forward(x_nhwc, p, compute_dtype=MATMUL_DTYPE):
    N, H, W, dim = x_nhwc.shape
    L = N * H * W

    operands = _prep_operands(x_nhwc, p, compute_dtype)

    def full_spec(shape):
        return pl.BlockSpec(shape, lambda i: (0,) * len(shape))

    out = pl.pallas_call(
        _fused_kernel,
        out_shape=jax.ShapeDtypeStruct((dim, L), x_nhwc.dtype),
        grid=(1,),                      # batch folded onto the lane axis
        in_specs=[full_spec(o.shape) for o in operands],
        out_specs=full_spec((dim, L)),
        compiler_params=pltpu.CompilerParams(
            dimension_semantics=("arbitrary",),
            vmem_limit_bytes=32 * 1024 * 1024),
    )(*operands)

    # (dim, N*H*W) lane-dense -> NHWC, in the wrapper (free relayout).
    return jnp.transpose(out.reshape(dim, N, H, W), (1, 2, 3, 0))


# ----------------------- pure-JAX reference (check) --------------------------

def _mish_ref(x):
    sp = jnp.maximum(x, 0.0) + jnp.log1p(jnp.exp(-jnp.abs(x)))
    return x * jnp.tanh(sp)


def _conv_ref(x, w_oihw, bias, pad, act):
    w = jnp.transpose(w_oihw, (2, 3, 1, 0))            # HWIO
    y = lax.conv_general_dilated(
        x, w, window_strides=(1, 1), padding=((pad, pad), (pad, pad)),
        dimension_numbers=("NHWC", "HWIO", "NHWC"))
    if bias is not None:
        y = y + bias[None, None, None, :]
    return _mish_ref(y) if act else y


def de_module_ref(x_nhwc, p):
    w_cd, w_ad, w_rd = effective_weights(p)
    c1 = _conv_ref(x_nhwc, p["w1"], p["b1"], 0, False)
    conv_x = _mish_ref(c1)
    cd = _conv_ref(c1, w_cd, None, 1, True)
    ad = _conv_ref(c1, w_ad, None, 1, True)
    rd = _conv_ref(c1, w_rd, None, 2, True)
    out = jnp.concatenate([conv_x, cd, ad, rd], axis=-1)
    out = _conv_ref(out, p["w3"], p["b3"], 0, True)
    x4 = _conv_ref(x_nhwc, p["w4"], p["b4"], 1, True)
    return jnp.concatenate([out, x4], axis=-1)


# --------------------------------- main --------------------------------------

if __name__ == "__main__":
    N, dim, H, W = 2, 8, 16, 16      # torch input would be (2, 8, 16, 16) NCHW
    key = jax.random.PRNGKey(0)
    kx, kp = jax.random.split(key)
    x_nhwc = jax.random.normal(kx, (N, H, W, dim), jnp.float32)
    params = make_params(dim, kp)

    fwd = jax.jit(de_module_forward)
    out = jax.block_until_ready(fwd(x_nhwc, params))
    assert out.shape == (N, H, W, dim), out.shape

    ref = jax.block_until_ready(de_module_ref(x_nhwc, params))
    # bf16 MXU operands (f32 accumulate) -> slightly looser tolerance than f32.
    if not jnp.allclose(out, ref, atol=4e-2, rtol=4e-2):
        raise AssertionError(
            f"mismatch vs reference, max abs diff = {jnp.max(jnp.abs(out - ref))}")

    print("KERNEL_OK")
</pallas_src>

<mosaic_0001>
module attributes {stable_mosaic.version = 11 : i64} {
  func.func @_fused_kernel(%arg0: i32, %arg1: memref<8x512xbf16, #tpu.memory_space<vmem>>, %arg2: memref<200x512xbf16, #tpu.memory_space<vmem>>, %arg3: memref<72x512xbf16, #tpu.memory_space<vmem>>, %arg4: memref<2x8xbf16, #tpu.memory_space<vmem>>, %arg5: memref<2x1xf32, #tpu.memory_space<vmem>>, %arg6: memref<6x200xbf16, #tpu.memory_space<vmem>>, %arg7: memref<6x512xf32, #tpu.memory_space<vmem>>, %arg8: memref<4x8xbf16, #tpu.memory_space<vmem>>, %arg9: memref<4x1xf32, #tpu.memory_space<vmem>>, %arg10: memref<4x72xbf16, #tpu.memory_space<vmem>>, %arg11: memref<4x1xf32, #tpu.memory_space<vmem>>, %arg12: memref<8x512xf32, #tpu.memory_space<vmem>>) attributes {dimension_semantics = [#tpu.dimension_semantics<arbitrary>], iteration_bounds = array<i64: 1>, scalar_prefetch = 0 : i64, scratch_operands = 0 : i64, tpu.core_type = #tpu.core_type<tc>, window_params = [{pipeline_mode = #tpu.pipeline_mode<synchronous>, transform_indices = @transform_0, window_bounds = array<i64: 8, 512>}, {pipeline_mode = #tpu.pipeline_mode<synchronous>, transform_indices = @transform_1, window_bounds = array<i64: 200, 512>}, {pipeline_mode = #tpu.pipeline_mode<synchronous>, transform_indices = @transform_2, window_bounds = array<i64: 72, 512>}, {pipeline_mode = #tpu.pipeline_mode<synchronous>, transform_indices = @transform_3, window_bounds = array<i64: 2, 8>}, {pipeline_mode = #tpu.pipeline_mode<synchronous>, transform_indices = @transform_4, window_bounds = array<i64: 2, 1>}, {pipeline_mode = #tpu.pipeline_mode<synchronous>, transform_indices = @transform_5, window_bounds = array<i64: 6, 200>}, {pipeline_mode = #tpu.pipeline_mode<synchronous>, transform_indices = @transform_6, window_bounds = array<i64: 6, 512>}, {pipeline_mode = #tpu.pipeline_mode<synchronous>, transform_indices = @transform_7, window_bounds = array<i64: 4, 8>}, {pipeline_mode = #tpu.pipeline_mode<synchronous>, transform_indices = @transform_8, window_bounds = array<i64: 4, 1>}, {pipeline_mode = #tpu.pipeline_mode<synchronous>, transform_indices = @transform_9, window_bounds = array<i64: 4, 72>}, {pipeline_mode = #tpu.pipeline_mode<synchronous>, transform_indices = @transform_10, window_bounds = array<i64: 4, 1>}, {pipeline_mode = #tpu.pipeline_mode<synchronous>, transform_indices = @transform_11, window_bounds = array<i64: 8, 512>}]} {
    %c0 = arith.constant 0 : index
    %c0_0 = arith.constant 0 : index
    %0 = vector.load %arg4[%c0, %c0_0] : memref<2x8xbf16, #tpu.memory_space<vmem>>, vector<2x8xbf16>
    %c0_1 = arith.constant 0 : index
    %c0_2 = arith.constant 0 : index
    %1 = vector.load %arg1[%c0_1, %c0_2] : memref<8x512xbf16, #tpu.memory_space<vmem>>, vector<8x512xbf16>
    %cst = arith.constant dense<0.000000e+00> : vector<2x512xf32>
    %2 = tpu.matmul %0, %1, %cst {dimension_numbers = #tpu.dot_dimension_numbers<[1], [0], [0], [1], [0, 0, 1, 1], [], []>} : vector<2x8xbf16>, vector<8x512xbf16>, vector<2x512xf32> -> vector<2x512xf32>
    %c0_3 = arith.constant 0 : index
    %c0_4 = arith.constant 0 : index
    %3 = vector.load %arg5[%c0_3, %c0_4] : memref<2x1xf32, #tpu.memory_space<vmem>>, vector<2x1xf32>
    %4 = vector.broadcast %3 : vector<2x1xf32> to vector<2x512xf32>
    %5 = arith.addf %2, %4 : vector<2x512xf32>
    %cst_5 = arith.constant 2.000000e+01 : f32
    %6 = vector.broadcast %cst_5 : f32 to vector<2x512xf32>
    %7 = arith.minimumf %5, %6 : vector<2x512xf32>
    %8 = math.exp %7 : vector<2x512xf32>
    %cst_6 = arith.constant 1.000000e+00 : f32
    %9 = vector.broadcast %cst_6 : f32 to vector<2x512xf32>
    %10 = arith.addf %9, %8 : vector<2x512xf32>
    %11 = arith.mulf %10, %10 : vector<2x512xf32>
    %cst_7 = arith.constant 1.000000e+00 : f32
    %12 = vector.broadcast %cst_7 : f32 to vector<2x512xf32>
    %13 = arith.subf %11, %12 : vector<2x512xf32>
    %14 = arith.mulf %5, %13 : vector<2x512xf32>
    %cst_8 = arith.constant 1.000000e+00 : f32
    %15 = vector.broadcast %cst_8 : f32 to vector<2x512xf32>
    %16 = arith.addf %11, %15 : vector<2x512xf32>
    %17 = tpu.reciprocal %16 {approx = true} : vector<2x512xf32> -> vector<2x512xf32>
    %18 = arith.mulf %14, %17 : vector<2x512xf32>
    %c0_9 = arith.constant 0 : index
    %c0_10 = arith.constant 0 : index
    %19 = vector.load %arg6[%c0_9, %c0_10] : memref<6x200xbf16, #tpu.memory_space<vmem>>, vector<6x200xbf16>
    %c0_11 = arith.constant 0 : index
    %c0_12 = arith.constant 0 : index
    %20 = vector.load %arg2[%c0_11, %c0_12] : memref<200x512xbf16, #tpu.memory_space<vmem>>, vector<200x512xbf16>
    %cst_13 = arith.constant dense<0.000000e+00> : vector<6x512xf32>
    %21 = tpu.matmul %19, %20, %cst_13 {dimension_numbers = #tpu.dot_dimension_numbers<[1], [0], [0], [1], [0, 0, 1, 1], [], []>} : vector<6x200xbf16>, vector<200x512xbf16>, vector<6x512xf32> -> vector<6x512xf32>
    %c0_14 = arith.constant 0 : index
    %c0_15 = arith.constant 0 : index
    %22 = vector.load %arg7[%c0_14, %c0_15] : memref<6x512xf32, #tpu.memory_space<vmem>>, vector<6x512xf32>
    %23 = arith.addf %21, %22 : vector<6x512xf32>
    %cst_16 = arith.constant 2.000000e+01 : f32
    %24 = vector.broadcast %cst_16 : f32 to vector<6x512xf32>
    %25 = arith.minimumf %23, %24 : vector<6x512xf32>
    %26 = math.exp %25 : vector<6x512xf32>
    %cst_17 = arith.constant 1.000000e+00 : f32
    %27 = vector.broadcast %cst_17 : f32 to vector<6x512xf32>
    %28 = arith.addf %27, %26 : vector<6x512xf32>
    %29 = arith.mulf %28, %28 : vector<6x512xf32>
    %cst_18 = arith.constant 1.000000e+00 : f32
    %30 = vector.broadcast %cst_18 : f32 to vector<6x512xf32>
    %31 = arith.subf %29, %30 : vector<6x512xf32>
    %32 = arith.mulf %23, %31 : vector<6x512xf32>
    %cst_19 = arith.constant 1.000000e+00 : f32
    %33 = vector.broadcast %cst_19 : f32 to vector<6x512xf32>
    %34 = arith.addf %29, %33 : vector<6x512xf32>
    %35 = tpu.reciprocal %34 {approx = true} : vector<6x512xf32> -> vector<6x512xf32>
    %36 = arith.mulf %32, %35 : vector<6x512xf32>
    %37 = tpu.concatenate %18, %36 in 0 : vector<2x512xf32>, vector<6x512xf32> -> vector<8x512xf32>
    %38 = arith.truncf %37 : vector<8x512xf32> to vector<8x512xbf16>
    %c0_20 = arith.constant 0 : index
    %c0_21 = arith.constant 0 : index
    %39 = vector.load %arg8[%c0_20, %c0_21] : memref<4x8xbf16, #tpu.memory_space<vmem>>, vector<4x8xbf16>
    %cst_22 = arith.constant dense<0.000000e+00> : vector<4x512xf32>
    %40 = tpu.matmul %39, %38, %cst_22 {dimension_numbers = #tpu.dot_dimension_numbers<[1], [0], [0], [1], [0, 0, 1, 1], [], []>} : vector<4x8xbf16>, vector<8x512xbf16>, vector<4x512xf32> -> vector<4x512xf32>
    %c0_23 = arith.constant 0 : index
    %c0_24 = arith.constant 0 : index
    %41 = vector.load %arg9[%c0_23, %c0_24] : memref<4x1xf32, #tpu.memory_space<vmem>>, vector<4x1xf32>
    %42 = vector.broadcast %41 : vector<4x1xf32> to vector<4x512xf32>
    %43 = arith.addf %40, %42 : vector<4x512xf32>
    %cst_25 = arith.constant 2.000000e+01 : f32
    %44 = vector.broadcast %cst_25 : f32 to vector<4x512xf32>
    %45 = arith.minimumf %43, %44 : vector<4x512xf32>
    %46 = math.exp %45 : vector<4x512xf32>
    %cst_26 = arith.constant 1.000000e+00 : f32
    %47 = vector.broadcast %cst_26 : f32 to vector<4x512xf32>
    %48 = arith.addf %47, %46 : vector<4x512xf32>
    %49 = arith.mulf %48, %48 : vector<4x512xf32>
    %cst_27 = arith.constant 1.000000e+00 : f32
    %50 = vector.broadcast %cst_27 : f32 to vector<4x512xf32>
    %51 = arith.subf %49, %50 : vector<4x512xf32>
    %52 = arith.mulf %43, %51 : vector<4x512xf32>
    %cst_28 = arith.constant 1.000000e+00 : f32
    %53 = vector.broadcast %cst_28 : f32 to vector<4x512xf32>
    %54 = arith.addf %49, %53 : vector<4x512xf32>
    %55 = tpu.reciprocal %54 {approx = true} : vector<4x512xf32> -> vector<4x512xf32>
    %56 = arith.mulf %52, %55 : vector<4x512xf32>
    %c0_29 = arith.constant 0 : index
    %c0_30 = arith.constant 0 : index
    %57 = vector.load %arg10[%c0_29, %c0_30] : memref<4x72xbf16, #tpu.memory_space<vmem>>, vector<4x72xbf16>
    %c0_31 = arith.constant 0 : index
    %c0_32 = arith.constant 0 : index
    %58 = vector.load %arg3[%c0_31, %c0_32] : memref<72x512xbf16, #tpu.memory_space<vmem>>, vector<72x512xbf16>
    %cst_33 = arith.constant dense<0.000000e+00> : vector<4x512xf32>
    %59 = tpu.matmul %57, %58, %cst_33 {dimension_numbers = #tpu.dot_dimension_numbers<[1], [0], [0], [1], [0, 0, 1, 1], [], []>} : vector<4x72xbf16>, vector<72x512xbf16>, vector<4x512xf32> -> vector<4x512xf32>
    %c0_34 = arith.constant 0 : index
    %c0_35 = arith.constant 0 : index
    %60 = vector.load %arg11[%c0_34, %c0_35] : memref<4x1xf32, #tpu.memory_space<vmem>>, vector<4x1xf32>
    %61 = vector.broadcast %60 : vector<4x1xf32> to vector<4x512xf32>
    %62 = arith.addf %59, %61 : vector<4x512xf32>
    %cst_36 = arith.constant 2.000000e+01 : f32
    %63 = vector.broadcast %cst_36 : f32 to vector<4x512xf32>
    %64 = arith.minimumf %62, %63 : vector<4x512xf32>
    %65 = math.exp %64 : vector<4x512xf32>
    %cst_37 = arith.constant 1.000000e+00 : f32
    %66 = vector.broadcast %cst_37 : f32 to vector<4x512xf32>
    %67 = arith.addf %66, %65 : vector<4x512xf32>
    %68 = arith.mulf %67, %67 : vector<4x512xf32>
    %cst_38 = arith.constant 1.000000e+00 : f32
    %69 = vector.broadcast %cst_38 : f32 to vector<4x512xf32>
    %70 = arith.subf %68, %69 : vector<4x512xf32>
    %71 = arith.mulf %62, %70 : vector<4x512xf32>
    %cst_39 = arith.constant 1.000000e+00 : f32
    %72 = vector.broadcast %cst_39 : f32 to vector<4x512xf32>
    %73 = arith.addf %68, %72 : vector<4x512xf32>
    %74 = tpu.reciprocal %73 {approx = true} : vector<4x512xf32> -> vector<4x512xf32>
    %75 = arith.mulf %71, %74 : vector<4x512xf32>
    %76 = tpu.concatenate %56, %75 in 0 : vector<4x512xf32>, vector<4x512xf32> -> vector<8x512xf32>
    %c0_40 = arith.constant 0 : index
    %c0_41 = arith.constant 0 : index
    %77 = vector.load %arg12[%c0_40, %c0_41] : memref<8x512xf32, #tpu.memory_space<vmem>>, vector<8x512xf32>
    tpu.vector_store %arg12[%c0_40, %c0_41], %76 {strides = array<i32>} : memref<8x512xf32, #tpu.memory_space<vmem>>, vector<8x512xf32>,
    return
  }
  func.func @transform_0(%arg0: i32) -> (i32, i32) {
    %c0_i32 = arith.constant 0 : i32
    %c0_i32_0 = arith.constant 0 : i32
    %c0_i32_1 = arith.constant 0 : i32
    return %c0_i32, %c0_i32_0 : i32, i32
  }
  func.func @transform_1(%arg0: i32) -> (i32, i32) {
    %c0_i32 = arith.constant 0 : i32
    %c0_i32_0 = arith.constant 0 : i32
    %c0_i32_1 = arith.constant 0 : i32
    return %c0_i32, %c0_i32_0 : i32, i32
  }
  func.func @transform_2(%arg0: i32) -> (i32, i32) {
    %c0_i32 = arith.constant 0 : i32
    %c0_i32_0 = arith.constant 0 : i32
    %c0_i32_1 = arith.constant 0 : i32
    return %c0_i32, %c0_i32_0 : i32, i32
  }
  func.func @transform_3(%arg0: i32) -> (i32, i32) {
    %c0_i32 = arith.constant 0 : i32
    %c0_i32_0 = arith.constant 0 : i32
    %c0_i32_1 = arith.constant 0 : i32
    return %c0_i32, %c0_i32_0 : i32, i32
  }
  func.func @transform_4(%arg0: i32) -> (i32, i32) {
    %c0_i32 = arith.constant 0 : i32
    %c0_i32_0 = arith.constant 0 : i32
    %c0_i32_1 = arith.constant 0 : i32
    return %c0_i32, %c0_i32_0 : i32, i32
  }
  func.func @transform_5(%arg0: i32) -> (i32, i32) {
    %c0_i32 = arith.constant 0 : i32
    %c0_i32_0 = arith.constant 0 : i32
    %c0_i32_1 = arith.constant 0 : i32
    return %c0_i32, %c0_i32_0 : i32, i32
  }
  func.func @transform_6(%arg0: i32) -> (i32, i32) {
    %c0_i32 = arith.constant 0 : i32
    %c0_i32_0 = arith.constant 0 : i32
    %c0_i32_1 = arith.constant 0 : i32
    return %c0_i32, %c0_i32_0 : i32, i32
  }
  func.func @transform_7(%arg0: i32) -> (i32, i32) {
    %c0_i32 = arith.constant 0 : i32
    %c0_i32_0 = arith.constant 0 : i32
    %c0_i32_1 = arith.constant 0 : i32
    return %c0_i32, %c0_i32_0 : i32, i32
  }
  func.func @transform_8(%arg0: i32) -> (i32, i32) {
    %c0_i32 = arith.constant 0 : i32
    %c0_i32_0 = arith.constant 0 : i32
    %c0_i32_1 = arith.constant 0 : i32
    return %c0_i32, %c0_i32_0 : i32, i32
  }
  func.func @transform_9(%arg0: i32) -> (i32, i32) {
    %c0_i32 = arith.constant 0 : i32
    %c0_i32_0 = arith.constant 0 : i32
    %c0_i32_1 = arith.constant 0 : i32
    return %c0_i32, %c0_i32_0 : i32, i32
  }
  func.func @transform_10(%arg0: i32) -> (i32, i32) {
    %c0_i32 = arith.constant 0 : i32
    %c0_i32_0 = arith.constant 0 : i32
    %c0_i32_1 = arith.constant 0 : i32
    return %c0_i32, %c0_i32_0 : i32, i32
  }
  func.func @transform_11(%arg0: i32) -> (i32, i32) {
    %c0_i32 = arith.constant 0 : i32
    %c0_i32_0 = arith.constant 0 : i32
    %c0_i32_1 = arith.constant 0 : i32
    return %c0_i32, %c0_i32_0 : i32, i32
  }
}

</mosaic_0001>

<llo_original>
// kernel: sub.0
$region0: #{sub.0}
  #allocation0 [shape = 's32[1]{0}', space=sflag, size = 0x4, scoped, tag = 'scoped memory for sub.0']
  %s0 = inlined_call_operand.vmem [shape: f32[2,2,3,3], index: 0, kind: input, shape index: {}]
  %s1 = inlined_call_operand.vmem [shape: f32[2,2,3,3], index: 1, kind: input, shape index: {}]
  %s2 = inlined_call_operand.vmem [shape: bf16[2,2,3,3], index: 2, kind: output, shape index: {}]
  %v3 = vld [vmem:[%s0] sm:$0x3]
  %v4 = vld [vmem:[%s1] sm:$0x3]
  %5 = xla_tuple %v3, %v4
  %6 = xla_tuple %5
  %v7 = vsub.f32 %v3, %v4
  %8 = xla_tuple %v7
  %v9 = vpack.c.bf16 0.0, %v7
  %10 = vst [vmem:[%s2] sm:$0x1] %v9
  %s11 = scalar_lea.vmem %s0, 6
  %v12 = vld [vmem:[%s11] sm:$0x3]
  %s13 = scalar_lea.vmem %s1, 6
  %v14 = vld [vmem:[%s13] sm:$0x3]
  %15 = xla_tuple %v12, %v14
  %16 = xla_tuple %15
  %v17 = vsub.f32 %v12, %v14
  %18 = xla_tuple %v17
  %s19 = scalar_lea.vmem %s2, 3
  %v20 = vpack.c.bf16 0.0, %v17
  %21 = vst [vmem:[%s19] sm:$0x1] %v20
  %s22 = scalar_lea.vmem %s0, 2
  %v23 = vld [vmem:[%s22] sm:$0x3]
  %s24 = scalar_lea.vmem %s1, 2
  %v25 = vld [vmem:[%s24] sm:$0x3]
  %26 = xla_tuple %v23, %v25
  %27 = xla_tuple %26
  %v28 = vsub.f32 %v23, %v25
  %29 = xla_tuple %v28
  %s30 = scalar_lea.vmem %s2, 1
  %v31 = vpack.c.bf16 0.0, %v28
  %32 = vst [vmem:[%s30] sm:$0x1] %v31
  %s33 = scalar_lea.vmem %s0, 8
  %v34 = vld [vmem:[%s33] sm:$0x3]
  %s35 = scalar_lea.vmem %s1, 8
  %v36 = vld [vmem:[%s35] sm:$0x3]
  %37 = xla_tuple %v34, %v36
  %38 = xla_tuple %37
  %v39 = vsub.f32 %v34, %v36
  %40 = xla_tuple %v39
  %s41 = scalar_lea.vmem %s2, 4
  %v42 = vpack.c.bf16 0.0, %v39
  %43 = vst [vmem:[%s41] sm:$0x1] %v42
  %s44 = scalar_lea.vmem %s0, 4
  %v45 = vld [vmem:[%s44] sm:$0x3]
  %s46 = scalar_lea.vmem %s1, 4
  %v47 = vld [vmem:[%s46] sm:$0x3]
  %48 = xla_tuple %v45, %v47
  %49 = xla_tuple %48
  %v50 = vsub.f32 %v45, %v47
  %51 = xla_tuple %v50
  %s52 = scalar_lea.vmem %s2, 2
  %v53 = vpack.c.bf16 0.0, %v50
  %54 = vst [vmem:[%s52] sm:$0x1] %v53
  %s55 = scalar_lea.vmem %s0, 10
  %v56 = vld [vmem:[%s55] sm:$0x3]
  %s57 = scalar_lea.vmem %s1, 10
  %v58 = vld [vmem:[%s57] sm:$0x3]
  %59 = xla_tuple %v56, %v58
  %60 = xla_tuple %59
  %v61 = vsub.f32 %v56, %v58
  %62 = xla_tuple %v61
  %s63 = scalar_lea.vmem %s2, 5
  %v64 = vpack.c.bf16 0.0, %v61
  %65 = vst [vmem:[%s63] sm:$0x1] %v64

// kernel: de_module_forward.1
$region0: #{de_module_forward.1}
  #allocation0 [shape = 'u32[]', space=smem, size = 0x4, offset = 0x4, fixed_abs, tag = 'smem constant byte address 0x4 - core index']
  #allocation1 [shape = 'u32[144,128]{1,0:T(1,128)}', space=vmem, size = 0x12000, scoped, tag = 'internal scratch']
  %s0 = inlined_call_operand.vmem [shape: bf16[8,512], index: 0, kind: input, shape index: {}]
  %s1 = inlined_call_operand.vmem [shape: bf16[200,512], index: 1, kind: input, shape index: {}]
  %s2 = inlined_call_operand.vmem [shape: bf16[72,512], index: 2, kind: input, shape index: {}]
  %s3 = inlined_call_operand.vmem [shape: bf16[2,8], index: 3, kind: input, shape index: {}]
  %s4 = inlined_call_operand.vmem [shape: f32[2,1], index: 4, kind: input, shape index: {}]
  %s5 = inlined_call_operand.vmem [shape: bf16[6,200], index: 5, kind: input, shape index: {}]
  %s6 = inlined_call_operand.vmem [shape: f32[6,512], index: 6, kind: input, shape index: {}]
  %s7 = inlined_call_operand.vmem [shape: bf16[4,8], index: 7, kind: input, shape index: {}]
  %s8 = inlined_call_operand.vmem [shape: f32[4,1], index: 8, kind: input, shape index: {}]
  %s9 = inlined_call_operand.vmem [shape: bf16[4,72], index: 9, kind: input, shape index: {}]
  %s10 = inlined_call_operand.vmem [shape: f32[4,1], index: 10, kind: input, shape index: {}]
  %s11 = inlined_call_operand.vmem [shape: f32[8,512], index: 11, kind: output, shape index: {}]
  %s12 = sld [smem:[#allocation0]]
  $region54: #{de_module_forward.1} parent=0
    _
  %s14 = ssub.s32 1, %s12
  %s15 = scalar_select 0, %s14, %s12
  // Predicated region
  $region2: #{de_module_forward.1} parent=0 // pred_check
    _
  $region3: #{de_module_forward.1} parent=0 // pred_check_branch
    %17 = sbr.rel (0) target = $region5
  $region4: #{de_module_forward.1} parent=0 // pred_region
    _
  $region5: #{de_module_forward.1} parent=0 // pred_fallthru
    _
  // Predicated region
  $region6: #{de_module_forward.1} parent=0 // pred_check
    _
  $region7: #{de_module_forward.1} parent=0 // pred_check_branch
    %19 = sbr.rel (0) target = $region9
  $region8: #{de_module_forward.1} parent=0 // pred_region
    _
  $region9: #{de_module_forward.1} parent=0 // pred_fallthru
    _
  // Predicated region
  $region10: #{de_module_forward.1} parent=0 // pred_check
    _
  $region11: #{de_module_forward.1} parent=0 // pred_check_branch
    %21 = sbr.rel (0) target = $region13
  $region12: #{de_module_forward.1} parent=0 // pred_region
    _
  $region13: #{de_module_forward.1} parent=0 // pred_fallthru
    _
  // Predicated region
  $region14: #{de_module_forward.1} parent=0 // pred_check
    _
  $region15: #{de_module_forward.1} parent=0 // pred_check_branch
    %23 = sbr.rel (0) target = $region17
  $region16: #{de_module_forward.1} parent=0 // pred_region
    _
  $region17: #{de_module_forward.1} parent=0 // pred_fallthru
    _
  // Predicated region
  $region18: #{de_module_forward.1} parent=0 // pred_check
    _
  $region19: #{de_module_forward.1} parent=0 // pred_check_branch
    %25 = sbr.rel (0) target = $region21
  $region20: #{de_module_forward.1} parent=0 // pred_region
    _
  $region21: #{de_module_forward.1} parent=0 // pred_fallthru
    _
  // Predicated region
  $region22: #{de_module_forward.1} parent=0 // pred_check
    _
  $region23: #{de_module_forward.1} parent=0 // pred_check_branch
    %27 = sbr.rel (0) target = $region25
  $region24: #{de_module_forward.1} parent=0 // pred_region
    _
  $region25: #{de_module_forward.1} parent=0 // pred_fallthru
    _
  // Predicated region
  $region26: #{de_module_forward.1} parent=0 // pred_check
    _
  $region27: #{de_module_forward.1} parent=0 // pred_check_branch
    %29 = sbr.rel (0) target = $region29
  $region28: #{de_module_forward.1} parent=0 // pred_region
    _
  $region29: #{de_module_forward.1} parent=0 // pred_fallthru
    _
  // Predicated region
  $region30: #{de_module_forward.1} parent=0 // pred_check
    _
  $region31: #{de_module_forward.1} parent=0 // pred_check_branch
    %31 = sbr.rel (0) target = $region33
  $region32: #{de_module_forward.1} parent=0 // pred_region
    _
  $region33: #{de_module_forward.1} parent=0 // pred_fallthru
    _
  // Predicated region
  $region34: #{de_module_forward.1} parent=0 // pred_check
    _
  $region35: #{de_module_forward.1} parent=0 // pred_check_branch
    %33 = sbr.rel (0) target = $region37
  $region36: #{de_module_forward.1} parent=0 // pred_region
    _
  $region37: #{de_module_forward.1} parent=0 // pred_fallthru
    _
  // Predicated region
  $region38: #{de_module_forward.1} parent=0 // pred_check
    _
  $region39: #{de_module_forward.1} parent=0 // pred_check_branch
    %35 = sbr.rel (0) target = $region41
  $region40: #{de_module_forward.1} parent=0 // pred_region
    _
  $region41: #{de_module_forward.1} parent=0 // pred_fallthru
    _
  // Predicated region
  $region42: #{de_module_forward.1} parent=0 // pred_check
    _
  $region43: #{de_module_forward.1} parent=0 // pred_check_branch
    %37 = sbr.rel (0) target = $region45
  $region44: #{de_module_forward.1} parent=0 // pred_region
    _
  $region45: #{de_module_forward.1} parent=0 // pred_fallthru
    _
  %v39 = vld [vmem:[%s3] sm:$0x1]
  %v40 = vld [vmem:[%s0] sm:$0xff]
  %v41 = vld [vmem:[%s0 + $0x8] sm:$0xff]
  %v42 = vld [vmem:[%s4] sm:$0x3]
  %44 = vset.pattern.permute.xlu0 0
  %45 = vperm.xlu0 %44, %v42
  %v46 = vpop.permute.xlu0 %45
  %v50 = vunpack.c.l.b16 %v40
  %v51 = vunpack.c.h.b16 %v40
  %v52 = vunpack.c.l.b16 %v41
  %v53 = vunpack.c.h.b16 %v41
  %v54 = vpack.c.b16 %v50, %v50
  %v55 = vpack.c.b16 %v51, %v51
  %v56 = vpack.c.b16 %v52, %v52
  %v57 = vpack.c.b16 %v53, %v53
  %vm58 = vcmask 64512
  %v60 = vsel %vm58, %v39, 0
  %vm62 = vcmask 1043456
  %v64 = vsel %vm62, %v54, 0
  %v67 = vsel %vm62, %v55, 0
  %v70 = vsel %vm62, %v56, 0
  %v73 = vsel %vm62, %v57, 0
  %75 = vmatprep.subr.bf16.mxu0 %v67
  %76 = vmatpush1.bf16.msra.mxu0 %v64
  %77 = vmatprep.subr.bf16.mxu0 0
  %78 = vmatpush1.bf16.msra.mxu0 0
  %79 = vmatprep.subr.bf16.mxu0 0
  %80 = vmatpush1.bf16.msra.mxu0 0
  %81 = vmatprep.subr.bf16.mxu0 0
  %82 = vmatpush1.bf16.msra.mxu0 0
  %83 = vmatprep.subr.bf16.mxu0 0
  %84 = vmatpush1.bf16.msra.mxu0 0
  %85 = vmatprep.subr.bf16.mxu0 0
  %86 = vmatpush1.bf16.msra.mxu0 0
  %87 = vmatprep.subr.bf16.mxu0 0
  %88 = vmatpush1.bf16.msra.mxu0 0
  %89 = vmatprep.subr.bf16.mxu0 0
  %90 = vmatpush1.bf16.msra.mxu0 0
  %91 = vmatprep.subr.bf16.mxu0 0
  %92 = vmatpush1.bf16.msra.mxu0 0
  %93 = vmatprep.subr.bf16.mxu0 0
  %94 = vmatpush1.bf16.msra.mxu0 0
  %95 = vmatprep.subr.bf16.mxu0 0
  %96 = vmatpush1.bf16.msra.mxu0 0
  %97 = vmatprep.subr.bf16.mxu0 0
  %98 = vmatpush1.bf16.msra.mxu0 0
  %99 = vmatprep.subr.bf16.mxu0 0
  %100 = vmatpush1.bf16.msra.mxu0 0
  %101 = vmatprep.subr.bf16.mxu0 0
  %102 = vmatpush1.bf16.msra.mxu0 0
  %103 = vmatprep.subr.bf16.mxu0 0
  %104 = vmatpush1.bf16.msra.mxu0 0
  %105 = vmatprep.subr.bf16.mxu0 0
  %106 = vmatpush1.bf16.msra.mxu0 0
  %107 = vmatprep.mubr.bf16.mxu0 0
  %108 = vmatmul.mubr.bf16.gmra.mrb[0].mxu0 %v60
  %v109 = vpop.f32.mrb[0].mxu0
  %v110 = vadd.f32 %v46, %v109
  %v111 = vpop.f32.mrb[0].mxu0
  %v112 = vadd.f32 %v46, %v111
  %v113 = vpop.f32.mrb[0].mxu0
  %v114 = vpop.f32.mrb[0].mxu0
  %115 = vdwg.mxu0
  %116 = vmatprep.subr.bf16.mxu0 %v73
  %117 = vmatpush1.bf16.msra.mxu0 %v70
  %118 = vmatprep.subr.bf16.mxu0 0
  %119 = vmatpush1.bf16.msra.mxu0 0
  %120 = vmatprep.subr.bf16.mxu0 0
  %121 = vmatpush1.bf16.msra.mxu0 0
  %122 = vmatprep.subr.bf16.mxu0 0
  %123 = vmatpush1.bf16.msra.mxu0 0
  %124 = vmatprep.subr.bf16.mxu0 0
  %125 = vmatpush1.bf16.msra.mxu0 0
  %126 = vmatprep.subr.bf16.mxu0 0
  %127 = vmatpush1.bf16.msra.mxu0 0
  %128 = vmatprep.subr.bf16.mxu0 0
  %129 = vmatpush1.bf16.msra.mxu0 0
  %130 = vmatprep.subr.bf16.mxu0 0
  %131 = vmatpush1.bf16.msra.mxu0 0
  %132 = vmatprep.subr.bf16.mxu0 0
  %133 = vmatpush1.bf16.msra.mxu0 0
  %134 = vmatprep.subr.bf16.mxu0 0
  %135 = vmatpush1.bf16.msra.mxu0 0
  %136 = vmatprep.subr.bf16.mxu0 0
  %137 = vmatpush1.bf16.msra.mxu0 0
  %138 = vmatprep.subr.bf16.mxu0 0
  %139 = vmatpush1.bf16.msra.mxu0 0
  %140 = vmatprep.subr.bf16.mxu0 0
  %141 = vmatpush1.bf16.msra.mxu0 0
  %142 = vmatprep.subr.bf16.mxu0 0
  %143 = vmatpush1.bf16.msra.mxu0 0
  %144 = vmatprep.subr.bf16.mxu0 0
  %145 = vmatpush1.bf16.msra.mxu0 0
  %146 = vmatprep.subr.bf16.mxu0 0
  %147 = vmatpush1.bf16.msra.mxu0 0
  %148 = vmatprep.mubr.bf16.mxu0 0
  %149 = vmatmul.mubr.bf16.gmra.mrb[0].mxu0 %v60
  %v150 = vpop.f32.mrb[0].mxu0
  %v151 = vadd.f32 %v46, %v150
  %v152 = vpop.f32.mrb[0].mxu0
  %v153 = vadd.f32 %v46, %v152
  %v154 = vpop.f32.mrb[0].mxu0
  %v155 = vpop.f32.mrb[0].mxu0
  %156 = vdwg.mxu0
  %v157 = vmin.f32 %v110, 20.0
  %v158 = vmin.f32 %v112, 20.0
  %v159 = vmin.f32 %v151, 20.0
  %v160 = vmin.f32 %v153, 20.0
  %v161 = vmul.f32 %v157, 1.442695
  %v162 = vpow.pop %v161
  %v163 = vmul.f32 %v158, 1.442695
  %v164 = vpow.pop %v163
  %v165 = vmul.f32 %v159, 1.442695
  %v166 = vpow.pop %v165
  %v167 = vmul.f32 %v160, 1.442695
  %v168 = vpow.pop %v167
  %v169 = vadd.f32 %v162, 1.0
  %v170 = vadd.f32 %v164, 1.0
  %v171 = vadd.f32 %v166, 1.0
  %v172 = vadd.f32 %v168, 1.0
  %v173 = vmul.f32 %v169, %v169
  %v174 = vmul.f32 %v170, %v170
  %v175 = vmul.f32 %v171, %v171
  %v176 = vmul.f32 %v172, %v172
  %v177 = vsub.f32 %v173, 1.0
  %v178 = vsub.f32 %v174, 1.0
  %v179 = vsub.f32 %v175, 1.0
  %v180 = vsub.f32 %v176, 1.0
  %v181 = vmul.f32 %v110, %v177
  %v182 = vmul.f32 %v112, %v178
  %v183 = vmul.f32 %v151, %v179
  %v184 = vmul.f32 %v153, %v180
  %v185 = vadd.f32 %v173, 1.0
  %v186 = vadd.f32 %v174, 1.0
  %v187 = vadd.f32 %v175, 1.0
  %v188 = vadd.f32 %v176, 1.0
  %v189 = vrcp.pop %v185
  %v190 = vrcp.pop %v186
  %v191 = vrcp.pop %v187
  %v192 = vrcp.pop %v188
  %v193 = vmul.f32 %v181, %v189
  %v194 = vmul.f32 %v182, %v190
  %v195 = vmul.f32 %v183, %v191
  %v196 = vmul.f32 %v184, %v192
  %v197 = vld [vmem:[%s5] sm:$0x77]
  %v198 = vld [vmem:[%s1] sm:$0xff]
  %v199 = vld [vmem:[%s1 + $0x8] sm:$0xff]
  %v200 = vld [vmem:[%s1 + $0x10] sm:$0xff]
  %v201 = vld [vmem:[%s1 + $0x18] sm:$0xff]
  %v202 = vld [vmem:[%s1 + $0x20] sm:$0xff]
  %v203 = vld [vmem:[%s1 + $0x28] sm:$0xff]
  %v204 = vld [vmem:[%s1 + $0x30] sm:$0xff]
  %v205 = vld [vmem:[%s1 + $0x38] sm:$0xff]
  %v206 = vld [vmem:[%s1 + $0x40] sm:$0xff]
  %v207 = vld [vmem:[%s1 + $0x48] sm:$0xff]
  %v208 = vld [vmem:[%s1 + $0x50] sm:$0xff]
  %v209 = vld [vmem:[%s1 + $0x58] sm:$0xff]
  %v210 = vld [vmem:[%s1 + $0x60] sm:$0xff]
  %v211 = vld [vmem:[%s1 + $0x68] sm:$0xff]
  %v212 = vld [vmem:[%s1 + $0x70] sm:$0xff]
  %v213 = vld [vmem:[%s1 + $0x78] sm:$0xff]
  %v214 = vld [vmem:[%s1 + $0x80] sm:$0xff]
  %v215 = vld [vmem:[%s1 + $0x88] sm:$0xff]
  %v216 = vld [vmem:[%s1 + $0x90] sm:$0xff]
  %v217 = vld [vmem:[%s1 + $0x98] sm:$0xff]
  %v218 = vld [vmem:[%s1 + $0xa0] sm:$0xff]
  %v219 = vld [vmem:[%s1 + $0xa8] sm:$0xff]
  %v220 = vld [vmem:[%s1 + $0xb0] sm:$0xff]
  %v221 = vld [vmem:[%s1 + $0xb8] sm:$0xff]
  %v222 = vld [vmem:[%s1 + $0xc0] sm:$0xff]
  %v223 = vld [vmem:[%s1 + $0xc8] sm:$0xff]
  %v224 = vld [vmem:[%s1 + $0xd0] sm:$0xff]
  %v225 = vld [vmem:[%s1 + $0xd8] sm:$0xff]
  %v226 = vld [vmem:[%s1 + $0xe0] sm:$0xff]
  %v227 = vld [vmem:[%s1 + $0xe8] sm:$0xff]
  %v228 = vld [vmem:[%s1 + $0xf0] sm:$0xff]
  %v229 = vld [vmem:[%s1 + $0xf8] sm:$0xff]
  %v230 = vld [vmem:[%s1 + $0x100] sm:$0xff]
  %v231 = vld [vmem:[%s1 + $0x108] sm:$0xff]
  %v232 = vld [vmem:[%s1 + $0x110] sm:$0xff]
  %v233 = vld [vmem:[%s1 + $0x118] sm:$0xff]
  %v234 = vld [vmem:[%s1 + $0x120] sm:$0xff]
  %v235 = vld [vmem:[%s1 + $0x128] sm:$0xff]
  %v236 = vld [vmem:[%s1 + $0x130] sm:$0xff]
  %v237 = vld [vmem:[%s1 + $0x138] sm:$0xff]
  %v238 = vld [vmem:[%s1 + $0x140] sm:$0xff]
  %v239 = vld [vmem:[%s1 + $0x148] sm:$0xff]
  %v240 = vld [vmem:[%s1 + $0x150] sm:$0xff]
  %v241 = vld [vmem:[%s1 + $0x158] sm:$0xff]
  %v242 = vld [vmem:[%s1 + $0x160] sm:$0xff]
  %v243 = vld [vmem:[%s1 + $0x168] sm:$0xff]
  %v244 = vld [vmem:[%s1 + $0x170] sm:$0xff]
  %v245 = vld [vmem:[%s1 + $0x178] sm:$0xff]
  %v246 = vld [vmem:[%s1 + $0x180] sm:$0xff]
  %v247 = vld [vmem:[%s1 + $0x188] sm:$0xff]
  %v248 = vld [vmem:[%s6] sm:$0x3f]
  %v249 = vld [vmem:[%s6 + $0x8] sm:$0x3f]
  %v250 = vld [vmem:[%s6 + $0x10] sm:$0x3f]
  %v251 = vld [vmem:[%s6 + $0x18] sm:$0x3f]
  %v253 = vunpack.c.l.b16 %v197
  %v254 = vunpack.c.h.b16 %v197
  %v255 = vpack.c.b16 %v253, %v253
  %v256 = vpack.c.b16 %v254, %v254
  %v308 = vunpack.c.l.b16 %v198
  %v309 = vunpack.c.h.b16 %v198
  %v310 = vunpack.c.l.b16 %v199
  %v311 = vunpack.c.h.b16 %v199
  %v312 = vunpack.c.l.b16 %v200
  %v313 = vunpack.c.h.b16 %v200
  %v314 = vunpack.c.l.b16 %v201
  %v315 = vunpack.c.h.b16 %v201
  %v316 = vunpack.c.l.b16 %v202
  %v317 = vunpack.c.h.b16 %v202
  %v318 = vunpack.c.l.b16 %v203
  %v319 = vunpack.c.h.b16 %v203
  %v320 = vunpack.c.l.b16 %v204
  %v321 = vunpack.c.h.b16 %v204
  %v322 = vunpack.c.l.b16 %v205
  %v323 = vunpack.c.h.b16 %v205
  %v324 = vunpack.c.l.b16 %v206
  %v325 = vunpack.c.h.b16 %v206
  %v326 = vunpack.c.l.b16 %v207
  %v327 = vunpack.c.h.b16 %v207
  %v328 = vunpack.c.l.b16 %v208
  %v329 = vunpack.c.h.b16 %v208
  %v330 = vunpack.c.l.b16 %v209
  %v331 = vunpack.c.h.b16 %v209
  %v332 = vunpack.c.l.b16 %v210
  %v333 = vunpack.c.h.b16 %v210
  %v334 = vunpack.c.l.b16 %v211
  %v335 = vunpack.c.h.b16 %v211
  %v336 = vunpack.c.l.b16 %v212
  %v337 = vunpack.c.h.b16 %v212
  %v338 = vunpack.c.l.b16 %v213
  %v339 = vunpack.c.h.b16 %v213
  %v340 = vunpack.c.l.b16 %v214
  %v341 = vunpack.c.h.b16 %v214
  %v342 = vunpack.c.l.b16 %v215
  %v343 = vunpack.c.h.b16 %v215
  %v344 = vunpack.c.l.b16 %v216
  %v345 = vunpack.c.h.b16 %v216
  %v346 = vunpack.c.l.b16 %v217
  %v347 = vunpack.c.h.b16 %v217
  %v348 = vunpack.c.l.b16 %v218
  %v349 = vunpack.c.h.b16 %v218
  %v350 = vunpack.c.l.b16 %v219
  %v351 = vunpack.c.h.b16 %v219
  %v352 = vunpack.c.l.b16 %v220
  %v353 = vunpack.c.h.b16 %v220
  %v354 = vunpack.c.l.b16 %v221
  %v355 = vunpack.c.h.b16 %v221
  %v356 = vunpack.c.l.b16 %v222
  %v357 = vunpack.c.h.b16 %v222
  %v358 = vunpack.c.l.b16 %v223
  %v359 = vunpack.c.h.b16 %v223
  %v360 = vunpack.c.l.b16 %v224
  %v361 = vunpack.c.h.b16 %v224
  %v362 = vunpack.c.l.b16 %v225
  %v363 = vunpack.c.h.b16 %v225
  %v364 = vunpack.c.l.b16 %v226
  %v365 = vunpack.c.h.b16 %v226
  %v366 = vunpack.c.l.b16 %v227
  %v367 = vunpack.c.h.b16 %v227
  %v368 = vunpack.c.l.b16 %v228
  %v369 = vunpack.c.h.b16 %v228
  %v370 = vunpack.c.l.b16 %v229
  %v371 = vunpack.c.h.b16 %v229
  %v372 = vunpack.c.l.b16 %v230
  %v373 = vunpack.c.h.b16 %v230
  %v374 = vunpack.c.l.b16 %v231
  %v375 = vunpack.c.h.b16 %v231
  %v376 = vunpack.c.l.b16 %v232
  %v377 = vunpack.c.h.b16 %v232
  %v378 = vunpack.c.l.b16 %v233
  %v379 = vunpack.c.h.b16 %v233
  %v380 = vunpack.c.l.b16 %v234
  %v381 = vunpack.c.h.b16 %v234
  %v382 = vunpack.c.l.b16 %v235
  %v383 = vunpack.c.h.b16 %v235
  %v384 = vunpack.c.l.b16 %v236
  %v385 = vunpack.c.h.b16 %v236
  %v386 = vunpack.c.l.b16 %v237
  %v387 = vunpack.c.h.b16 %v237
  %v388 = vunpack.c.l.b16 %v238
  %v389 = vunpack.c.h.b16 %v238
  %v390 = vunpack.c.l.b16 %v239
  %v391 = vunpack.c.h.b16 %v239
  %v392 = vunpack.c.l.b16 %v240
  %v393 = vunpack.c.h.b16 %v240
  %v394 = vunpack.c.l.b16 %v241
  %v395 = vunpack.c.h.b16 %v241
  %v396 = vunpack.c.l.b16 %v242
  %v397 = vunpack.c.h.b16 %v242
  %v398 = vunpack.c.l.b16 %v243
  %v399 = vunpack.c.h.b16 %v243
  %v400 = vunpack.c.l.b16 %v244
  %v401 = vunpack.c.h.b16 %v244
  %v402 = vunpack.c.l.b16 %v245
  %v403 = vunpack.c.h.b16 %v245
  %v404 = vunpack.c.l.b16 %v246
  %v405 = vunpack.c.h.b16 %v246
  %v406 = vunpack.c.l.b16 %v247
  %v407 = vunpack.c.h.b16 %v247
  %v408 = vpack.c.b16 %v312, %v308
  %v409 = vpack.c.b16 %v313, %v309
  %v410 = vpack.c.b16 %v314, %v310
  %v411 = vpack.c.b16 %v315, %v311
  %v412 = vpack.c.b16 %v320, %v316
  %v413 = vpack.c.b16 %v321, %v317
  %v414 = vpack.c.b16 %v322, %v318
  %v415 = vpack.c.b16 %v323, %v319
  %v416 = vpack.c.b16 %v328, %v324
  %v417 = vpack.c.b16 %v329, %v325
  %v418 = vpack.c.b16 %v330, %v326
  %v419 = vpack.c.b16 %v331, %v327
  %v420 = vpack.c.b16 %v336, %v332
  %v421 = vpack.c.b16 %v337, %v333
  %v422 = vpack.c.b16 %v338, %v334
  %v423 = vpack.c.b16 %v339, %v335
  %v424 = vpack.c.b16 %v344, %v340
  %v425 = vpack.c.b16 %v345, %v341
  %v426 = vpack.c.b16 %v346, %v342
  %v427 = vpack.c.b16 %v347, %v343
  %v428 = vpack.c.b16 %v352, %v348
  %v429 = vpack.c.b16 %v353, %v349
  %v430 = vpack.c.b16 %v354, %v350
  %v431 = vpack.c.b16 %v355, %v351
  %v432 = vpack.c.b16 %v360, %v356
  %v433 = vpack.c.b16 %v361, %v357
  %v434 = vpack.c.b16 %v362, %v358
  %v435 = vpack.c.b16 %v363, %v359
  %v436 = vpack.c.b16 %v368, %v364
  %v437 = vpack.c.b16 %v369, %v365
  %v438 = vpack.c.b16 %v370, %v366
  %v439 = vpack.c.b16 %v371, %v367
  %v440 = vpack.c.b16 %v376, %v372
  %v441 = vpack.c.b16 %v377, %v373
  %v442 = vpack.c.b16 %v378, %v374
  %v443 = vpack.c.b16 %v379, %v375
  %v444 = vpack.c.b16 %v384, %v380
  %v445 = vpack.c.b16 %v385, %v381
  %v446 = vpack.c.b16 %v386, %v382
  %v447 = vpack.c.b16 %v387, %v383
  %v448 = vpack.c.b16 %v392, %v388
  %v449 = vpack.c.b16 %v393, %v389
  %v450 = vpack.c.b16 %v394, %v390
  %v451 = vpack.c.b16 %v395, %v391
  %v452 = vpack.c.b16 %v400, %v396
  %v453 = vpack.c.b16 %v401, %v397
  %v454 = vpack.c.b16 %v402, %v398
  %v455 = vpack.c.b16 %v403, %v399
  %v456 = vpack.c.b16 %v404, %v404
  %v457 = vpack.c.b16 %v405, %v405
  %v458 = vpack.c.b16 %v406, %v406
  %v459 = vpack.c.b16 %v407, %v407
  %vm508 = vcmask 588800
  %v510 = vsel %vm508, %v256, 0
  %v513 = vsel %vm62, %v456, 0
  %v516 = vsel %vm62, %v457, 0
  %v519 = vsel %vm62, %v458, 0
  %v522 = vsel %vm62, %v459, 0
  %524 = vmatprep.subr.bf16.mxu0 %v409
  %525 = vmatpush1.bf16.msra.mxu0 %v408
  %526 = vmatprep.subr.bf16.mxu0 %v413
  %527 = vmatpush1.bf16.msra.mxu0 %v412
  %528 = vmatprep.subr.bf16.mxu0 %v417
  %529 = vmatpush1.bf16.msra.mxu0 %v416
  %530 = vmatprep.subr.bf16.mxu0 %v421
  %531 = vmatpush1.bf16.msra.mxu0 %v420
  %532 = vmatprep.subr.bf16.mxu0 %v425
  %533 = vmatpush1.bf16.msra.mxu0 %v424
  %534 = vmatprep.subr.bf16.mxu0 %v429
  %535 = vmatpush1.bf16.msra.mxu0 %v428
  %536 = vmatprep.subr.bf16.mxu0 %v433
  %537 = vmatpush1.bf16.msra.mxu0 %v432
  %538 = vmatprep.subr.bf16.mxu0 %v437
  %539 = vmatpush1.bf16.msra.mxu0 %v436
  %540 = vmatprep.subr.bf16.mxu0 %v441
  %541 = vmatpush1.bf16.msra.mxu0 %v440
  %542 = vmatprep.subr.bf16.mxu0 %v445
  %543 = vmatpush1.bf16.msra.mxu0 %v444
  %544 = vmatprep.subr.bf16.mxu0 %v449
  %545 = vmatpush1.bf16.msra.mxu0 %v448
  %546 = vmatprep.subr.bf16.mxu0 %v453
  %547 = vmatpush1.bf16.msra.mxu0 %v452
  %548 = vmatprep.subr.bf16.mxu0 %v516
  %549 = vmatpush1.bf16.msra.mxu0 %v513
  %550 = vmatprep.subr.bf16.mxu0 0
  %551 = vmatpush1.bf16.msra.mxu0 0
  %552 = vmatprep.subr.bf16.mxu0 0
  %553 = vmatpush1.bf16.msra.mxu0 0
  %554 = vmatprep.subr.bf16.mxu0 0
  %555 = vmatpush1.bf16.msra.mxu0 0
  %556 = vmatprep.mubr.bf16.mxu0 %v510
  %557 = vmatmul.mubr.bf16.gmra.mrb[0].mxu0 %v255
  %v558 = vpop.f32.mrb[0].mxu0
  %v559 = vadd.f32 %v248, %v558
  %v560 = vpop.f32.mrb[0].mxu0
  %v561 = vadd.f32 %v249, %v560
  %v562 = vpop.f32.mrb[0].mxu0
  %v563 = vpop.f32.mrb[0].mxu0
  %564 = vdwg.mxu0
  %565 = vmatprep.subr.bf16.mxu0 %v411
  %566 = vmatpush1.bf16.msra.mxu0 %v410
  %567 = vmatprep.subr.bf16.mxu0 %v415
  %568 = vmatpush1.bf16.msra.mxu0 %v414
  %569 = vmatprep.subr.bf16.mxu0 %v419
  %570 = vmatpush1.bf16.msra.mxu0 %v418
  %571 = vmatprep.subr.bf16.mxu0 %v423
  %572 = vmatpush1.bf16.msra.mxu0 %v422
  %573 = vmatprep.subr.bf16.mxu0 %v427
  %574 = vmatpush1.bf16.msra.mxu0 %v426
  %575 = vmatprep.subr.bf16.mxu0 %v431
  %576 = vmatpush1.bf16.msra.mxu0 %v430
  %577 = vmatprep.subr.bf16.mxu0 %v435
  %578 = vmatpush1.bf16.msra.mxu0 %v434
  %579 = vmatprep.subr.bf16.mxu0 %v439
  %580 = vmatpush1.bf16.msra.mxu0 %v438
  %581 = vmatprep.subr.bf16.mxu0 %v443
  %582 = vmatpush1.bf16.msra.mxu0 %v442
  %583 = vmatprep.subr.bf16.mxu0 %v447
  %584 = vmatpush1.bf16.msra.mxu0 %v446
  %585 = vmatprep.subr.bf16.mxu0 %v451
  %586 = vmatpush1.bf16.msra.mxu0 %v450
  %587 = vmatprep.subr.bf16.mxu0 %v455
  %588 = vmatpush1.bf16.msra.mxu0 %v454
  %589 = vmatprep.subr.bf16.mxu0 %v522
  %590 = vmatpush1.bf16.msra.mxu0 %v519
  %591 = vmatprep.subr.bf16.mxu0 0
  %592 = vmatpush1.bf16.msra.mxu0 0
  %593 = vmatprep.subr.bf16.mxu0 0
  %594 = vmatpush1.bf16.msra.mxu0 0
  %595 = vmatprep.subr.bf16.mxu0 0
  %596 = vmatpush1.bf16.msra.mxu0 0
  %597 = vmatprep.mubr.bf16.mxu0 %v510
  %598 = vmatmul.mubr.bf16.gmra.mrb[0].mxu0 %v255
  %v599 = vpop.f32.mrb[0].mxu0
  %v600 = vadd.f32 %v250, %v599
  %v601 = vpop.f32.mrb[0].mxu0
  %v602 = vadd.f32 %v251, %v601
  %v603 = vpop.f32.mrb[0].mxu0
  %v604 = vpop.f32.mrb[0].mxu0
  %605 = vdwg.mxu0
  %v606 = vmin.f32 %v559, 20.0
  %v607 = vmin.f32 %v561, 20.0
  %v608 = vmin.f32 %v600, 20.0
  %v609 = vmin.f32 %v602, 20.0
  %v610 = vmul.f32 %v606, 1.442695
  %v611 = vpow.pop %v610
  %v612 = vmul.f32 %v607, 1.442695
  %v613 = vpow.pop %v612
  %v614 = vmul.f32 %v608, 1.442695
  %v615 = vpow.pop %v614
  %v616 = vmul.f32 %v609, 1.442695
  %v617 = vpow.pop %v616
  %v618 = vadd.f32 %v611, 1.0
  %v619 = vadd.f32 %v613, 1.0
  %v620 = vadd.f32 %v615, 1.0
  %v621 = vadd.f32 %v617, 1.0
  %v622 = vmul.f32 %v618, %v618
  %v623 = vmul.f32 %v619, %v619
  %v624 = vmul.f32 %v620, %v620
  %v625 = vmul.f32 %v621, %v621
  %v626 = vsub.f32 %v622, 1.0
  %v627 = vsub.f32 %v623, 1.0
  %v628 = vsub.f32 %v624, 1.0
  %v629 = vsub.f32 %v625, 1.0
  %v630 = vmul.f32 %v559, %v626
  %v631 = vmul.f32 %v561, %v627
  %v632 = vmul.f32 %v600, %v628
  %v633 = vmul.f32 %v602, %v629
  %v634 = vadd.f32 %v622, 1.0
  %v635 = vadd.f32 %v623, 1.0
  %v636 = vadd.f32 %v624, 1.0
  %v637 = vadd.f32 %v625, 1.0
  %v638 = vrcp.pop %v634
  %v639 = vrcp.pop %v635
  %v640 = vrcp.pop %v636
  %v641 = vrcp.pop %v637
  %v642 = vmul.f32 %v630, %v638
  %v643 = vmul.f32 %v631, %v639
  %v644 = vmul.f32 %v632, %v640
  %v645 = vmul.f32 %v633, %v641
  %v650 = vrot.slane %v642, 6
  %v651 = vrot.slane %v643, 6
  %v652 = vrot.slane %v644, 6
  %v653 = vrot.slane %v645, 6
  %vm658 = vcmask 1041408
  %v659 = vsel %vm658, %v193, %v650
  %v660 = vsel %vm658, %v194, %v651
  %v661 = vsel %vm658, %v195, %v652
  %v662 = vsel %vm658, %v196, %v653
  %v663 = vpack.c.bf16 %v659, %v659
  %v664 = vpack.c.bf16 %v660, %v660
  %v665 = vpack.c.bf16 %v661, %v661
  %v666 = vpack.c.bf16 %v662, %v662
  %v667 = vld [vmem:[%s7] sm:$0x3]
  %v668 = vld [vmem:[%s8] sm:$0xf]
  %670 = vset.pattern.permute.xlu0 0
  %671 = vperm.xlu0 %670, %v668
  %v672 = vpop.permute.xlu0 %671
  %v675 = vsel %vm58, %v667, 0
  %v678 = vsel %vm62, %v663, 0
  %v681 = vsel %vm62, %v664, 0
  %v684 = vsel %vm62, %v665, 0
  %v687 = vsel %vm62, %v666, 0
  %689 = vmatprep.subr.bf16.mxu0 %v681
  %690 = vmatpush1.bf16.msra.mxu0 %v678
  %691 = vmatprep.subr.bf16.mxu0 0
  %692 = vmatpush1.bf16.msra.mxu0 0
  %693 = vmatprep.subr.bf16.mxu0 0
  %694 = vmatpush1.bf16.msra.mxu0 0
  %695 = vmatprep.subr.bf16.mxu0 0
  %696 = vmatpush1.bf16.msra.mxu0 0
  %697 = vmatprep.subr.bf16.mxu0 0
  %698 = vmatpush1.bf16.msra.mxu0 0
  %699 = vmatprep.subr.bf16.mxu0 0
  %700 = vmatpush1.bf16.msra.mxu0 0
  %701 = vmatprep.subr.bf16.mxu0 0
  %702 = vmatpush1.bf16.msra.mxu0 0
  %703 = vmatprep.subr.bf16.mxu0 0
  %704 = vmatpush1.bf16.msra.mxu0 0
  %705 = vmatprep.subr.bf16.mxu0 0
  %706 = vmatpush1.bf16.msra.mxu0 0
  %707 = vmatprep.subr.bf16.mxu0 0
  %708 = vmatpush1.bf16.msra.mxu0 0
  %709 = vmatprep.subr.bf16.mxu0 0
  %710 = vmatpush1.bf16.msra.mxu0 0
  %711 = vmatprep.subr.bf16.mxu0 0
  %712 = vmatpush1.bf16.msra.mxu0 0
  %713 = vmatprep.subr.bf16.mxu0 0
  %714 = vmatpush1.bf16.msra.mxu0 0
  %715 = vmatprep.subr.bf16.mxu0 0
  %716 = vmatpush1.bf16.msra.mxu0 0
  %717 = vmatprep.subr.bf16.mxu0 0
  %718 = vmatpush1.bf16.msra.mxu0 0
  %719 = vmatprep.subr.bf16.mxu0 0
  %720 = vmatpush1.bf16.msra.mxu0 0
  %721 = vmatprep.mubr.bf16.mxu0 0
  %722 = vmatmul.mubr.bf16.gmra.mrb[0].mxu0 %v675
  %v723 = vpop.f32.mrb[0].mxu0
  %v724 = vadd.f32 %v672, %v723
  %v725 = vpop.f32.mrb[0].mxu0
  %v726 = vadd.f32 %v672, %v725
  %v727 = vpop.f32.mrb[0].mxu0
  %v728 = vpop.f32.mrb[0].mxu0
  %729 = vdwg.mxu0
  %730 = vmatprep.subr.bf16.mxu0 %v687
  %731 = vmatpush1.bf16.msra.mxu0 %v684
  %732 = vmatprep.subr.bf16.mxu0 0
  %733 = vmatpush1.bf16.msra.mxu0 0
  %734 = vmatprep.subr.bf16.mxu0 0
  %735 = vmatpush1.bf16.msra.mxu0 0
  %736 = vmatprep.subr.bf16.mxu0 0
  %737 = vmatpush1.bf16.msra.mxu0 0
  %738 = vmatprep.subr.bf16.mxu0 0
  %739 = vmatpush1.bf16.msra.mxu0 0
  %740 = vmatprep.subr.bf16.mxu0 0
  %741 = vmatpush1.bf16.msra.mxu0 0
  %742 = vmatprep.subr.bf16.mxu0 0
  %743 = vmatpush1.bf16.msra.mxu0 0
  %744 = vmatprep.subr.bf16.mxu0 0
  %745 = vmatpush1.bf16.msra.mxu0 0
  %746 = vmatprep.subr.bf16.mxu0 0
  %747 = vmatpush1.bf16.msra.mxu0 0
  %748 = vmatprep.subr.bf16.mxu0 0
  %749 = vmatpush1.bf16.msra.mxu0 0
  %750 = vmatprep.subr.bf16.mxu0 0
  %751 = vmatpush1.bf16.msra.mxu0 0
  %752 = vmatprep.subr.bf16.mxu0 0
  %753 = vmatpush1.bf16.msra.mxu0 0
  %754 = vmatprep.subr.bf16.mxu0 0
  %755 = vmatpush1.bf16.msra.mxu0 0
  %756 = vmatprep.subr.bf16.mxu0 0
  %757 = vmatpush1.bf16.msra.mxu0 0
  %758 = vmatprep.subr.bf16.mxu0 0
  %759 = vmatpush1.bf16.msra.mxu0 0
  %760 = vmatprep.subr.bf16.mxu0 0
  %761 = vmatpush1.bf16.msra.mxu0 0
  %762 = vmatprep.mubr.bf16.mxu0 0
  %763 = vmatmul.mubr.bf16.gmra.mrb[0].mxu0 %v675
  %v764 = vpop.f32.mrb[0].mxu0
  %v765 = vadd.f32 %v672, %v764
  %v766 = vpop.f32.mrb[0].mxu0
  %v767 = vadd.f32 %v672, %v766
  %v768 = vpop.f32.mrb[0].mxu0
  %v769 = vpop.f32.mrb[0].mxu0
  %770 = vdwg.mxu0
  %v771 = vmin.f32 %v724, 20.0
  %v772 = vmin.f32 %v726, 20.0
  %v773 = vmin.f32 %v765, 20.0
  %v774 = vmin.f32 %v767, 20.0
  %v775 = vmul.f32 %v771, 1.442695
  %v776 = vpow.pop %v775
  %v777 = vmul.f32 %v772, 1.442695
  %v778 = vpow.pop %v777
  %v779 = vmul.f32 %v773, 1.442695
  %v780 = vpow.pop %v779
  %v781 = vmul.f32 %v774, 1.442695
  %v782 = vpow.pop %v781
  %v783 = vadd.f32 %v776, 1.0
  %v784 = vadd.f32 %v778, 1.0
  %v785 = vadd.f32 %v780, 1.0
  %v786 = vadd.f32 %v782, 1.0
  %v787 = vmul.f32 %v783, %v783
  %v788 = vmul.f32 %v784, %v784
  %v789 = vmul.f32 %v785, %v785
  %v790 = vmul.f32 %v786, %v786
  %v791 = vsub.f32 %v787, 1.0
  %v792 = vsub.f32 %v788, 1.0
  %v793 = vsub.f32 %v789, 1.0
  %v794 = vsub.f32 %v790, 1.0
  %v795 = vmul.f32 %v724, %v791
  %v796 = vmul.f32 %v726, %v792
  %v797 = vmul.f32 %v765, %v793
  %v798 = vmul.f32 %v767, %v794
  %v799 = vadd.f32 %v787, 1.0
  %v800 = vadd.f32 %v788, 1.0
  %v801 = vadd.f32 %v789, 1.0
  %v802 = vadd.f32 %v790, 1.0
  %v803 = vrcp.pop %v799
  %v804 = vrcp.pop %v800
  %v805 = vrcp.pop %v801
  %v806 = vrcp.pop %v802
  %v807 = vmul.f32 %v795, %v803
  %v808 = vmul.f32 %v796, %v804
  %v809 = vmul.f32 %v797, %v805
  %v810 = vmul.f32 %v798, %v806
  %v811 = vld [vmem:[%s9] sm:$0x3]
  %v812 = vld [vmem:[%s2] sm:$0xff]
  %v813 = vld [vmem:[%s2 + $0x8] sm:$0xff]
  %v814 = vld [vmem:[%s2 + $0x10] sm:$0xff]
  %v815 = vld [vmem:[%s2 + $0x18] sm:$0xff]
  %v816 = vld [vmem:[%s2 + $0x20] sm:$0xff]
  %v817 = vld [vmem:[%s2 + $0x28] sm:$0xff]
  %v818 = vld [vmem:[%s2 + $0x30] sm:$0xff]
  %v819 = vld [vmem:[%s2 + $0x38] sm:$0xff]
  %v820 = vld [vmem:[%s2 + $0x40] sm:$0xff]
  %v821 = vld [vmem:[%s2 + $0x48] sm:$0xff]
  %v822 = vld [vmem:[%s2 + $0x50] sm:$0xff]
  %v823 = vld [vmem:[%s2 + $0x58] sm:$0xff]
  %v824 = vld [vmem:[%s2 + $0x60] sm:$0xff]
  %v825 = vld [vmem:[%s2 + $0x68] sm:$0xff]
  %v826 = vld [vmem:[%s2 + $0x70] sm:$0xff]
  %v827 = vld [vmem:[%s2 + $0x78] sm:$0xff]
  %v828 = vld [vmem:[%s2 + $0x80] sm:$0xff]
  %v829 = vld [vmem:[%s2 + $0x88] sm:$0xff]
  %v830 = vld [vmem:[%s10] sm:$0xf]
  %832 = vset.pattern.permute.xlu0 0
  %833 = vperm.xlu0 %832, %v830
  %v834 = vpop.permute.xlu0 %833
  %v854 = vunpack.c.l.b16 %v812
  %v855 = vunpack.c.h.b16 %v812
  %v856 = vunpack.c.l.b16 %v813
  %v857 = vunpack.c.h.b16 %v813
  %v858 = vunpack.c.l.b16 %v814
  %v859 = vunpack.c.h.b16 %v814
  %v860 = vunpack.c.l.b16 %v815
  %v861 = vunpack.c.h.b16 %v815
  %v862 = vunpack.c.l.b16 %v816
  %v863 = vunpack.c.h.b16 %v816
  %v864 = vunpack.c.l.b16 %v817
  %v865 = vunpack.c.h.b16 %v817
  %v866 = vunpack.c.l.b16 %v818
  %v867 = vunpack.c.h.b16 %v818
  %v868 = vunpack.c.l.b16 %v819
  %v869 = vunpack.c.h.b16 %v819
  %v870 = vunpack.c.l.b16 %v820
  %v871 = vunpack.c.h.b16 %v820
  %v872 = vunpack.c.l.b16 %v821
  %v873 = vunpack.c.h.b16 %v821
  %v874 = vunpack.c.l.b16 %v822
  %v875 = vunpack.c.h.b16 %v822
  %v876 = vunpack.c.l.b16 %v823
  %v877 = vunpack.c.h.b16 %v823
  %v878 = vunpack.c.l.b16 %v824
  %v879 = vunpack.c.h.b16 %v824
  %v880 = vunpack.c.l.b16 %v825
  %v881 = vunpack.c.h.b16 %v825
  %v882 = vunpack.c.l.b16 %v826
  %v883 = vunpack.c.h.b16 %v826
  %v884 = vunpack.c.l.b16 %v827
  %v885 = vunpack.c.h.b16 %v827
  %v886 = vunpack.c.l.b16 %v828
  %v887 = vunpack.c.h.b16 %v828
  %v888 = vunpack.c.l.b16 %v829
  %v889 = vunpack.c.h.b16 %v829
  %v890 = vpack.c.b16 %v858, %v854
  %v891 = vpack.c.b16 %v859, %v855
  %v892 = vpack.c.b16 %v860, %v856
  %v893 = vpack.c.b16 %v861, %v857
  %v894 = vpack.c.b16 %v866, %v862
  %v895 = vpack.c.b16 %v867, %v863
  %v896 = vpack.c.b16 %v868, %v864
  %v897 = vpack.c.b16 %v869, %v865
  %v898 = vpack.c.b16 %v874, %v870
  %v899 = vpack.c.b16 %v875, %v871
  %v900 = vpack.c.b16 %v876, %v872
  %v901 = vpack.c.b16 %v877, %v873
  %v902 = vpack.c.b16 %v882, %v878
  %v903 = vpack.c.b16 %v883, %v879
  %v904 = vpack.c.b16 %v884, %v880
  %v905 = vpack.c.b16 %v885, %v881
  %v906 = vpack.c.b16 %v886, %v886
  %v907 = vpack.c.b16 %v887, %v887
  %v908 = vpack.c.b16 %v888, %v888
  %v909 = vpack.c.b16 %v889, %v889
  %v927 = vsel %vm508, %v811, 0
  %v930 = vsel %vm62, %v906, 0
  %v933 = vsel %vm62, %v907, 0
  %v936 = vsel %vm62, %v908, 0
  %v939 = vsel %vm62, %v909, 0
  %941 = vmatprep.subr.bf16.mxu0 %v891
  %942 = vmatpush1.bf16.msra.mxu0 %v890
  %943 = vmatprep.subr.bf16.mxu0 %v895
  %944 = vmatpush1.bf16.msra.mxu0 %v894
  %945 = vmatprep.subr.bf16.mxu0 %v899
  %946 = vmatpush1.bf16.msra.mxu0 %v898
  %947 = vmatprep.subr.bf16.mxu0 %v903
  %948 = vmatpush1.bf16.msra.mxu0 %v902
  %949 = vmatprep.subr.bf16.mxu0 %v933
  %950 = vmatpush1.bf16.msra.mxu0 %v930
  %951 = vmatprep.subr.bf16.mxu0 0
  %952 = vmatpush1.bf16.msra.mxu0 0
  %953 = vmatprep.subr.bf16.mxu0 0
  %954 = vmatpush1.bf16.msra.mxu0 0
  %955 = vmatprep.subr.bf16.mxu0 0
  %956 = vmatpush1.bf16.msra.mxu0 0
  %957 = vmatprep.subr.bf16.mxu0 0
  %958 = vmatpush1.bf16.msra.mxu0 0
  %959 = vmatprep.subr.bf16.mxu0 0
  %960 = vmatpush1.bf16.msra.mxu0 0
  %961 = vmatprep.subr.bf16.mxu0 0
  %962 = vmatpush1.bf16.msra.mxu0 0
  %963 = vmatprep.subr.bf16.mxu0 0
  %964 = vmatpush1.bf16.msra.mxu0 0
  %965 = vmatprep.subr.bf16.mxu0 0
  %966 = vmatpush1.bf16.msra.mxu0 0
  %967 = vmatprep.subr.bf16.mxu0 0
  %968 = vmatpush1.bf16.msra.mxu0 0
  %969 = vmatprep.subr.bf16.mxu0 0
  %970 = vmatpush1.bf16.msra.mxu0 0
  %971 = vmatprep.subr.bf16.mxu0 0
  %972 = vmatpush1.bf16.msra.mxu0 0
  %973 = vmatprep.mubr.bf16.mxu0 0
  %974 = vmatmul.mubr.bf16.gmra.mrb[0].mxu0 %v927
  %v975 = vpop.f32.mrb[0].mxu0
  %v976 = vadd.f32 %v834, %v975
  %v977 = vpop.f32.mrb[0].mxu0
  %v978 = vadd.f32 %v834, %v977
  %v979 = vpop.f32.mrb[0].mxu0
  %v980 = vpop.f32.mrb[0].mxu0
  %981 = vdwg.mxu0
  %982 = vmatprep.subr.bf16.mxu0 %v893
  %983 = vmatpush1.bf16.msra.mxu0 %v892
  %984 = vmatprep.subr.bf16.mxu0 %v897
  %985 = vmatpush1.bf16.msra.mxu0 %v896
  %986 = vmatprep.subr.bf16.mxu0 %v901
  %987 = vmatpush1.bf16.msra.mxu0 %v900
  %988 = vmatprep.subr.bf16.mxu0 %v905
  %989 = vmatpush1.bf16.msra.mxu0 %v904
  %990 = vmatprep.subr.bf16.mxu0 %v939
  %991 = vmatpush1.bf16.msra.mxu0 %v936
  %992 = vmatprep.subr.bf16.mxu0 0
  %993 = vmatpush1.bf16.msra.mxu0 0
  %994 = vmatprep.subr.bf16.mxu0 0
  %995 = vmatpush1.bf16.msra.mxu0 0
  %996 = vmatprep.subr.bf16.mxu0 0
  %997 = vmatpush1.bf16.msra.mxu0 0
  %998 = vmatprep.subr.bf16.mxu0 0
  %999 = vmatpush1.bf16.msra.mxu0 0
  %1000 = vmatprep.subr.bf16.mxu0 0
  %1001 = vmatpush1.bf16.msra.mxu0 0
  %1002 = vmatprep.subr.bf16.mxu0 0
  %1003 = vmatpush1.bf16.msra.mxu0 0
  %1004 = vmatprep.subr.bf16.mxu0 0
  %1005 = vmatpush1.bf16.msra.mxu0 0
  %1006 = vmatprep.subr.bf16.mxu0 0
  %1007 = vmatpush1.bf16.msra.mxu0 0
  %1008 = vmatprep.subr.bf16.mxu0 0
  %1009 = vmatpush1.bf16.msra.mxu0 0
  %1010 = vmatprep.subr.bf16.mxu0 0
  %1011 = vmatpush1.bf16.msra.mxu0 0
  %1012 = vmatprep.subr.bf16.mxu0 0
  %1013 = vmatpush1.bf16.msra.mxu0 0
  %1014 = vmatprep.mubr.bf16.mxu0 0
  %1015 = vmatmul.mubr.bf16.gmra.mrb[0].mxu0 %v927
  %v1016 = vpop.f32.mrb[0].mxu0
  %v1017 = vadd.f32 %v834, %v1016
  %v1018 = vpop.f32.mrb[0].mxu0
  %v1019 = vadd.f32 %v834, %v1018
  %v1020 = vpop.f32.mrb[0].mxu0
  %v1021 = vpop.f32.mrb[0].mxu0
  %1022 = vdwg.mxu0
  %v1023 = vmin.f32 %v976, 20.0
  %v1024 = vmin.f32 %v978, 20.0
  %v1025 = vmin.f32 %v1017, 20.0
  %v1026 = vmin.f32 %v1019, 20.0
  %v1027 = vmul.f32 %v1023, 1.442695
  %v1028 = vpow.pop %v1027
  %v1029 = vmul.f32 %v1024, 1.442695
  %v1030 = vpow.pop %v1029
  %v1031 = vmul.f32 %v1025, 1.442695
  %v1032 = vpow.pop %v1031
  %v1033 = vmul.f32 %v1026, 1.442695
  %v1034 = vpow.pop %v1033
  %v1035 = vadd.f32 %v1028, 1.0
  %v1036 = vadd.f32 %v1030, 1.0
  %v1037 = vadd.f32 %v1032, 1.0
  %v1038 = vadd.f32 %v1034, 1.0
  %v1039 = vmul.f32 %v1035, %v1035
  %v1040 = vmul.f32 %v1036, %v1036
  %v1041 = vmul.f32 %v1037, %v1037
  %v1042 = vmul.f32 %v1038, %v1038
  %v1043 = vsub.f32 %v1039, 1.0
  %v1044 = vsub.f32 %v1040, 1.0
  %v1045 = vsub.f32 %v1041, 1.0
  %v1046 = vsub.f32 %v1042, 1.0
  %v1047 = vmul.f32 %v976, %v1043
  %v1048 = vmul.f32 %v978, %v1044
  %v1049 = vmul.f32 %v1017, %v1045
  %v1050 = vmul.f32 %v1019, %v1046
  %v1051 = vadd.f32 %v1039, 1.0
  %v1052 = vadd.f32 %v1040, 1.0
  %v1053 = vadd.f32 %v1041, 1.0
  %v1054 = vadd.f32 %v1042, 1.0
  %v1055 = vrcp.pop %v1051
  %v1056 = vrcp.pop %v1052
  %v1057 = vrcp.pop %v1053
  %v1058 = vrcp.pop %v1054
  %v1059 = vmul.f32 %v1047, %v1055
  %v1060 = vmul.f32 %v1048, %v1056
  %v1061 = vmul.f32 %v1049, %v1057
  %v1062 = vmul.f32 %v1050, %v1058
  %v1067 = vrot.slane %v1059, 4
  %v1068 = vrot.slane %v1060, 4
  %v1069 = vrot.slane %v1061, 4
  %v1070 = vrot.slane %v1062, 4
  %v1075 = vsel %vm62, %v807, %v1067
  %v1076 = vsel %vm62, %v808, %v1068
  %v1077 = vsel %vm62, %v809, %v1069
  %v1078 = vsel %vm62, %v810, %v1070
  %1079 = vst [vmem:[%s11] sm:$0xff] %v1075
  %1080 = vst [vmem:[%s11 + $0x8] sm:$0xff] %v1076
  %1081 = vst [vmem:[%s11 + $0x10] sm:$0xff] %v1077
  %1082 = vst [vmem:[%s11 + $0x18] sm:$0xff] %v1078
  // Predicated region
  $region46: #{de_module_forward.1} parent=0 // pred_check
    _
  $region47: #{de_module_forward.1} parent=0 // pred_check_branch
    %1084 = sbr.rel (0) target = $region49
  $region48: #{de_module_forward.1} parent=0 // pred_region
    _
  $region49: #{de_module_forward.1} parent=0 // pred_fallthru
    _
  // Predicated region
  $region50: #{de_module_forward.1} parent=0 // pred_check
    _
  $region51: #{de_module_forward.1} parent=0 // pred_check_branch
    %1086 = sbr.rel (0) target = $region53
  $region52: #{de_module_forward.1} parent=0 // pred_region
    _
  $region53: #{de_module_forward.1} parent=0 // pred_fallthru
    _

</llo_original>
